<compile_context>
chip_gen: v7x
topology: tpu7x:2x2x1
jax: 0.10.0
libtpu: 0.0.40
codegen_flags: <defaults>
</compile_context>

<pallas_src>
import jax
import jax.numpy as jnp
from jax.experimental import pallas as pl
from jax.experimental.pallas import tpu as pltpu

E = 200          # conv kernel width, fixed by nn.Conv2d(1, 1, (1, 200))
SEQ_LEN = 128    # small synthetic SEQ_LEN (len(var)+1 in the original script)
FC1_DIM = 512
H_DIM = 100
OUT_DIM = 10

_LANE = 128
_SUBLANE = 8


def _round_up(v, m):
    return ((v + m - 1) // m) * m


def _round_down(v, m):
    return (v // m) * m


def identity_kernel(x_ref, wc_ref, bc_ref,
                    w1_ref, b1_ref, w2_ref, b2_ref, w3_ref, b3_ref,
                    o_ref):
    # Conv2d(1, 1, (1, 200)) over a width-200 input == weighted sum over E
    # (VPU multiply + XLU lane reduce); conv bias is a scalar read from SMEM.
    # TODO(synk): if xprof on v7x shows this reduce surfacing from under the
    # DMA, rewrite it as an MXU contraction (dot against wc reshaped (E, 1)).
    x = x_ref[...]                                       # (TB, S, E)
    h0 = jnp.sum(x * wc_ref[...], axis=-1) + bc_ref[0]   # (TB, S)
    h0 = jnp.maximum(h0, 0.0)                            # ReLU

    # fc1 + ReLU   (dropout p=0.0 is the identity -> omitted)
    h1 = jnp.dot(h0, w1_ref[...], preferred_element_type=jnp.float32) + b1_ref[...]
    h1 = jnp.maximum(h1, 0.0)

    # fc2 + ReLU
    h2 = jnp.dot(h1, w2_ref[...], preferred_element_type=jnp.float32) + b2_ref[...]
    h2 = jnp.maximum(h2, 0.0)

    # fc3
    o_ref[...] = (jnp.dot(h2, w3_ref[...], preferred_element_type=jnp.float32)
                  + b3_ref[...])


# Whole-array specs: VMEM for vector data, SMEM for the scalar conv bias.
_VMEM = pl.BlockSpec(memory_space=pltpu.MemorySpace.VMEM)
_SMEM = pl.BlockSpec(memory_space=pltpu.MemorySpace.SMEM)
_WEIGHT_SPECS = [_VMEM, _SMEM, _VMEM, _VMEM, _VMEM, _VMEM, _VMEM, _VMEM]

# Padded f32 VMEM footprints under (8, 128) tiling.
_X_ROW_BYTES = SEQ_LEN * _round_up(E, _LANE) * 4            # one batch row of x (200 -> 256 lanes)
_OUT_ROW_BYTES = _round_up(OUT_DIM, _LANE) * 4              # one output row (10 -> 128 lanes)
_WEIGHT_BYTES = (
    _SUBLANE * _round_up(E, _LANE) * 4                       # conv weight (1,1,200)
    + SEQ_LEN * FC1_DIM * 4 + _SUBLANE * FC1_DIM * 4         # fc1 W, b
    + FC1_DIM * _round_up(H_DIM, _LANE) * 4                  # fc2 W
    + _SUBLANE * _round_up(H_DIM, _LANE) * 4                 # fc2 b
    + _round_up(H_DIM, _SUBLANE) * _round_up(OUT_DIM, _LANE) * 4   # fc3 W
    + _SUBLANE * _round_up(OUT_DIM, _LANE) * 4               # fc3 b
)
_SLACK_BYTES = 1 << 20   # headroom for compiler-internal scratch / bookkeeping


def _physical_vmem_bytes():
    """Per-TensorCore VMEM; conservative (v7x = 64 MiB) fallback if unavailable."""
    try:
        info = pltpu.get_tpu_info()
        v = int(getattr(info, "vmem_capacity_bytes", 0))
        if v > 0:
            return v
    except Exception:
        pass
    return 64 << 20


def _default_vmem_limit_bytes():
    # 3/4 of physical leaves headroom; this also lifts v5e's 16 MiB scoped default.
    return (_physical_vmem_bytes() * 3) // 4


def _auto_batch_tile(bsz, budget):
    """Largest 8-aligned tile whose double-buffered x DMA fits beside the
    VMEM-resident weights, soft-capped so the grid keeps >=4 steps (v7x megacore)."""
    avail = max(budget - _WEIGHT_BYTES - _SLACK_BYTES, 0)
    tb = _round_down(avail // (2 * _X_ROW_BYTES), _SUBLANE)
    tb = min(tb, _round_up(pl.cdiv(bsz, 4), _SUBLANE))
    return max(tb, _SUBLANE)


def identity_forward(x, params, *, batch_tile=None, vmem_limit_bytes=None):
    """Forward pass.

    batch_tile=None: VMEM-derived dispatch -- gridless whole-array path when the
    padded footprint fits in half the scoped budget, otherwise a batch-only grid
    with the largest tile that double-buffers within vmem_limit_bytes.
    """
    wc, bc, w1, b1, w2, b2, w3, b3 = params
    bsz = x.shape[0]
    budget = int(vmem_limit_bytes) if vmem_limit_bytes else _default_vmem_limit_bytes()

    if batch_tile is None:
        gridless_bytes = bsz * (_X_ROW_BYTES + _OUT_ROW_BYTES) + _WEIGHT_BYTES
        tb = None if gridless_bytes <= budget // 2 else _auto_batch_tile(bsz, budget)
    else:
        tb = int(batch_tile)
    if tb is not None and (tb >= bsz or pl.cdiv(bsz, tb) < 2):
        # One whole-array DMA beats a 1-step "pipeline" for a ~us kernel.
        tb = None

    if tb is None:
        # Gridless path: no per-step overhead, no double buffering of 9 operands.
        return pl.pallas_call(
            identity_kernel,
            out_shape=jax.ShapeDtypeStruct((bsz, OUT_DIM), jnp.float32),
            in_specs=[_VMEM] + _WEIGHT_SPECS,
            out_specs=_VMEM,
            compiler_params=pltpu.CompilerParams(vmem_limit_bytes=budget),
        )(x, wc, bc, w1, b1, w2, b2, w3, b3)

    # Gridded path: grid over batch only. x is the only per-step DMA; weights
    # (~0.6 MB padded) stay VMEM-resident; 'parallel' lets v7x's two TCs split it.
    # If bsz % tb != 0 the last step computes on padded/unspecified x rows; this
    # is benign because every op is row-independent and Pallas drops the
    # out-of-range output rows -- do NOT add cross-row (batch-reduction) ops here.
    return pl.pallas_call(
        identity_kernel,
        out_shape=jax.ShapeDtypeStruct((bsz, OUT_DIM), jnp.float32),
        grid=(pl.cdiv(bsz, tb),),
        in_specs=[pl.BlockSpec((tb, SEQ_LEN, E), lambda i: (i, 0, 0))]
                 + _WEIGHT_SPECS,
        out_specs=pl.BlockSpec((tb, OUT_DIM), lambda i: (i, 0)),
        compiler_params=pltpu.CompilerParams(
            dimension_semantics=("parallel",),
            vmem_limit_bytes=budget),
    )(x, wc, bc, w1, b1, w2, b2, w3, b3)


def reference_forward(x, params):
    wc, bc, w1, b1, w2, b2, w3, b3 = params
    h0 = jnp.maximum(jnp.sum(x * wc, axis=-1) + bc[0], 0.0)
    h1 = jnp.maximum(h0 @ w1 + b1, 0.0)
    h2 = jnp.maximum(h1 @ w2 + b2, 0.0)
    return h2 @ w3 + b3


def init_params(key):
    # Deterministic PyTorch-style uniform(-1/sqrt(fan_in), +1/sqrt(fan_in)) init.
    ks = jax.random.split(key, 8)

    def uinit(k, shape, fan_in):
        bound = 1.0 / float(fan_in) ** 0.5
        return jax.random.uniform(k, shape, jnp.float32, -bound, bound)

    wc = uinit(ks[0], (1, 1, E), E)            # conv weight, kernel (1, 200)
    bc = uinit(ks[1], (1,), E)                 # conv bias (scalar, lives in SMEM)
    w1 = uinit(ks[2], (SEQ_LEN, FC1_DIM), SEQ_LEN)
    b1 = uinit(ks[3], (1, FC1_DIM), SEQ_LEN)
    w2 = uinit(ks[4], (FC1_DIM, H_DIM), FC1_DIM)
    b2 = uinit(ks[5], (1, H_DIM), FC1_DIM)
    w3 = uinit(ks[6], (H_DIM, OUT_DIM), H_DIM)
    b3 = uinit(ks[7], (1, OUT_DIM), H_DIM)
    return (wc, bc, w1, b1, w2, b2, w3, b3)


if __name__ == "__main__":
    key = jax.random.PRNGKey(0)
    k_params, k_x1, k_x2 = jax.random.split(key, 3)
    params = init_params(k_params)

    # Small case (batch=2, SEQ_LEN=128, E=200): auto-dispatch -> gridless path.
    x_small = jax.random.normal(k_x1, (2, SEQ_LEN, E), jnp.float32)
    out_small = jax.block_until_ready(identity_forward(x_small, params))
    ref_small = jax.block_until_ready(reference_forward(x_small, params))
    assert out_small.shape == (2, OUT_DIM)
    assert jnp.allclose(out_small, ref_small, atol=1e-4, rtol=1e-4)

    # Gridded path (explicit batch_tile): VMEM-resident weights, batch 'parallel'.
    x_big = jax.random.normal(k_x2, (64, SEQ_LEN, E), jnp.float32)
    out_big = jax.block_until_ready(
        identity_forward(x_big, params, batch_tile=32))
    ref_big = jax.block_until_ready(reference_forward(x_big, params))
    assert out_big.shape == (64, OUT_DIM)
    assert jnp.allclose(out_big, ref_big, atol=1e-4, rtol=1e-4)

    # Auto-dispatch on the same batch: VMEM-derived cutover picks the gridless
    # path (~9 MB padded) on every generation.
    out_auto = jax.block_until_ready(identity_forward(x_big, params))
    assert jnp.allclose(out_auto, ref_big, atol=1e-4, rtol=1e-4)

    print("KERNEL_OK")
</pallas_src>

<mosaic_0001>
module attributes {stable_mosaic.version = 11 : i64} {
  func.func @identity_kernel(%arg0: memref<2x128x200xf32, #tpu.memory_space<vmem>>, %arg1: memref<1x1x200xf32, #tpu.memory_space<vmem>>, %arg2: memref<1xf32, #tpu.memory_space<smem>>, %arg3: memref<128x512xf32, #tpu.memory_space<vmem>>, %arg4: memref<1x512xf32, #tpu.memory_space<vmem>>, %arg5: memref<512x100xf32, #tpu.memory_space<vmem>>, %arg6: memref<1x100xf32, #tpu.memory_space<vmem>>, %arg7: memref<100x10xf32, #tpu.memory_space<vmem>>, %arg8: memref<1x10xf32, #tpu.memory_space<vmem>>, %arg9: memref<2x10xf32, #tpu.memory_space<vmem>>) attributes {dimension_semantics = [], scalar_prefetch = 0 : i64, scratch_operands = 0 : i64, tpu.core_type = #tpu.core_type<tc>} {
    %c0 = arith.constant 0 : index
    %c0_0 = arith.constant 0 : index
    %c0_1 = arith.constant 0 : index
    %0 = vector.load %arg0[%c0, %c0_0, %c0_1] : memref<2x128x200xf32, #tpu.memory_space<vmem>>, vector<2x128x200xf32>
    %c0_2 = arith.constant 0 : index
    %c0_3 = arith.constant 0 : index
    %c0_4 = arith.constant 0 : index
    %1 = vector.load %arg1[%c0_2, %c0_3, %c0_4] : memref<1x1x200xf32, #tpu.memory_space<vmem>>, vector<1x1x200xf32>
    %2 = vector.broadcast %1 : vector<1x1x200xf32> to vector<2x128x200xf32>
    %3 = arith.mulf %0, %2 : vector<2x128x200xf32>
    %cst = arith.constant dense<0.000000e+00> : vector<2x128xf32>
    %4 = vector.multi_reduction <add>, %3, %cst [2] : vector<2x128x200xf32> to vector<2x128xf32>
    %c0_5 = arith.constant 0 : index
    %5 = memref.load %arg2[%c0_5] : memref<1xf32, #tpu.memory_space<smem>>
    %6 = vector.broadcast %5 : f32 to vector<2x128xf32>
    %7 = arith.addf %4, %6 : vector<2x128xf32>
    %cst_6 = arith.constant 0.000000e+00 : f32
    %8 = vector.broadcast %cst_6 : f32 to vector<2x128xf32>
    %9 = arith.maximumf %7, %8 : vector<2x128xf32>
    %c0_7 = arith.constant 0 : index
    %c0_8 = arith.constant 0 : index
    %10 = vector.load %arg3[%c0_7, %c0_8] : memref<128x512xf32, #tpu.memory_space<vmem>>, vector<128x512xf32>
    %cst_9 = arith.constant dense<0.000000e+00> : vector<2x512xf32>
    %11 = tpu.matmul %9, %10, %cst_9 {dimension_numbers = #tpu.dot_dimension_numbers<[1], [0], [0], [1], [0, 0, 1, 1], [], []>} : vector<2x128xf32>, vector<128x512xf32>, vector<2x512xf32> -> vector<2x512xf32>
    %c0_10 = arith.constant 0 : index
    %c0_11 = arith.constant 0 : index
    %12 = vector.load %arg4[%c0_10, %c0_11] : memref<1x512xf32, #tpu.memory_space<vmem>>, vector<1x512xf32>
    %13 = vector.broadcast %12 : vector<1x512xf32> to vector<2x512xf32>
    %14 = arith.addf %11, %13 : vector<2x512xf32>
    %cst_12 = arith.constant 0.000000e+00 : f32
    %15 = vector.broadcast %cst_12 : f32 to vector<2x512xf32>
    %16 = arith.maximumf %14, %15 : vector<2x512xf32>
    %c0_13 = arith.constant 0 : index
    %c0_14 = arith.constant 0 : index
    %17 = vector.load %arg5[%c0_13, %c0_14] : memref<512x100xf32, #tpu.memory_space<vmem>>, vector<512x100xf32>
    %cst_15 = arith.constant dense<0.000000e+00> : vector<2x100xf32>
    %18 = tpu.matmul %16, %17, %cst_15 {dimension_numbers = #tpu.dot_dimension_numbers<[1], [0], [0], [1], [0, 0, 1, 1], [], []>} : vector<2x512xf32>, vector<512x100xf32>, vector<2x100xf32> -> vector<2x100xf32>
    %c0_16 = arith.constant 0 : index
    %c0_17 = arith.constant 0 : index
    %19 = vector.load %arg6[%c0_16, %c0_17] : memref<1x100xf32, #tpu.memory_space<vmem>>, vector<1x100xf32>
    %20 = vector.broadcast %19 : vector<1x100xf32> to vector<2x100xf32>
    %21 = arith.addf %18, %20 : vector<2x100xf32>
    %cst_18 = arith.constant 0.000000e+00 : f32
    %22 = vector.broadcast %cst_18 : f32 to vector<2x100xf32>
    %23 = arith.maximumf %21, %22 : vector<2x100xf32>
    %c0_19 = arith.constant 0 : index
    %c0_20 = arith.constant 0 : index
    %24 = vector.load %arg7[%c0_19, %c0_20] : memref<100x10xf32, #tpu.memory_space<vmem>>, vector<100x10xf32>
    %cst_21 = arith.constant dense<0.000000e+00> : vector<2x10xf32>
    %25 = tpu.matmul %23, %24, %cst_21 {dimension_numbers = #tpu.dot_dimension_numbers<[1], [0], [0], [1], [0, 0, 1, 1], [], []>} : vector<2x100xf32>, vector<100x10xf32>, vector<2x10xf32> -> vector<2x10xf32>
    %c0_22 = arith.constant 0 : index
    %c0_23 = arith.constant 0 : index
    %26 = vector.load %arg8[%c0_22, %c0_23] : memref<1x10xf32, #tpu.memory_space<vmem>>, vector<1x10xf32>
    %27 = vector.broadcast %26 : vector<1x10xf32> to vector<2x10xf32>
    %28 = arith.addf %25, %27 : vector<2x10xf32>
    %c0_24 = arith.constant 0 : index
    %c0_25 = arith.constant 0 : index
    %29 = vector.load %arg9[%c0_24, %c0_25] : memref<2x10xf32, #tpu.memory_space<vmem>>, vector<2x10xf32>
    tpu.vector_store %arg9[%c0_24, %c0_25], %28 {strides = array<i32>} : memref<2x10xf32, #tpu.memory_space<vmem>>, vector<2x10xf32>,
    return
  }
}

</mosaic_0001>

<llo_original>
// kernel: tpu_custom_call.1
$region0: #{tpu_custom_call.1}
  #allocation0 [shape = 'u32[]', space=smem, size = 0x4, offset = 0x4, fixed_abs, tag = 'smem constant byte address 0x4 - core index']
  #allocation1 [shape = 'u32[144,128]{1,0:T(1,128)}', space=vmem, size = 0x12000, scoped, tag = 'internal scratch']
  #allocation2 [shape = 'f32[1]{0:T(128)S(6)}', space=smem, size = 0x200, scoped, tag = 'scoped memory for tpu_custom_call.1']
  %s0 = inlined_call_operand.vmem [shape: f32[2,128,200], index: 0, kind: input, shape index: {}]
  %s1 = inlined_call_operand.vmem [shape: f32[1,1,200], index: 1, kind: input, shape index: {}]
  %s2 = inlined_call_operand.<no memory space> [shape: f32[1], index: 2, kind: input, shape index: {}]
  %s3 = inlined_call_operand.vmem [shape: f32[128,512], index: 3, kind: input, shape index: {}]
  %s4 = inlined_call_operand.vmem [shape: f32[1,512], index: 4, kind: input, shape index: {}]
  %s5 = inlined_call_operand.vmem [shape: f32[512,100], index: 5, kind: input, shape index: {}]
  %s6 = inlined_call_operand.vmem [shape: f32[1,100], index: 6, kind: input, shape index: {}]
  %s7 = inlined_call_operand.vmem [shape: f32[100,10], index: 7, kind: input, shape index: {}]
  %s8 = inlined_call_operand.vmem [shape: f32[1,10], index: 8, kind: input, shape index: {}]
  %s9 = inlined_call_operand.hbm [shape: f32[2,10], index: 9, kind: output, shape index: {}]
  %s10 = sld [smem:[#allocation0]]
  $region46: #{tpu_custom_call.1} parent=0
    _
  %s12 = ssub.s32 1, %s10
  %s13 = scalar_select 0, %s12, %s10
  %14 = sst [smem:[#allocation2]] %s2
  $region1: #{tpu_custom_call.1} parent=0
    #allocation3 [shape = 'u8[1024]{0}', space=vmem, size = 0x400, scoped, tag = 'output window, operand 0, single buffered']
    #allocation4 [shape = 's32[1]{0}', space=sflag, size = 0x4, scoped, tag = 'scoped memory for tpu_custom_call.1']
    %15 = vsyncpa [#allocation4], 0
    // Predicated region
    $region2: #{tpu_custom_call.1} parent=1 // pred_check
      _
    $region3: #{tpu_custom_call.1} parent=1 // pred_check_branch
      %17 = sbr.rel (0) target = $region5
    $region4: #{tpu_custom_call.1} parent=1 // pred_region
      _
    $region5: #{tpu_custom_call.1} parent=1 // pred_fallthru
      _
    // Predicated region
    $region6: #{tpu_custom_call.1} parent=1 // pred_check
      _
    $region7: #{tpu_custom_call.1} parent=1 // pred_check_branch
      %19 = sbr.rel (0) target = $region9
    $region8: #{tpu_custom_call.1} parent=1 // pred_region
      _
    $region9: #{tpu_custom_call.1} parent=1 // pred_fallthru
      _
    // Predicated region
    $region10: #{tpu_custom_call.1} parent=1 // pred_check
      _
    $region11: #{tpu_custom_call.1} parent=1 // pred_check_branch
      %21 = sbr.rel (0) target = $region13
    $region12: #{tpu_custom_call.1} parent=1 // pred_region
      _
    $region13: #{tpu_custom_call.1} parent=1 // pred_fallthru
      _
    // Predicated region
    $region14: #{tpu_custom_call.1} parent=1 // pred_check
      _
    $region15: #{tpu_custom_call.1} parent=1 // pred_check_branch
      %23 = sbr.rel (0) target = $region17
    $region16: #{tpu_custom_call.1} parent=1 // pred_region
      _
    $region17: #{tpu_custom_call.1} parent=1 // pred_fallthru
      _
    // Predicated region
    $region18: #{tpu_custom_call.1} parent=1 // pred_check
      _
    $region19: #{tpu_custom_call.1} parent=1 // pred_check_branch
      %25 = sbr.rel (0) target = $region21
    $region20: #{tpu_custom_call.1} parent=1 // pred_region
      _
    $region21: #{tpu_custom_call.1} parent=1 // pred_fallthru
      _
    // Predicated region
    $region22: #{tpu_custom_call.1} parent=1 // pred_check
      _
    $region23: #{tpu_custom_call.1} parent=1 // pred_check_branch
      %27 = sbr.rel (0) target = $region25
    $region24: #{tpu_custom_call.1} parent=1 // pred_region
      _
    $region25: #{tpu_custom_call.1} parent=1 // pred_fallthru
      _
    // Predicated region
    $region26: #{tpu_custom_call.1} parent=1 // pred_check
      _
    $region27: #{tpu_custom_call.1} parent=1 // pred_check_branch
      %29 = sbr.rel (0) target = $region29
    $region28: #{tpu_custom_call.1} parent=1 // pred_region
      _
    $region29: #{tpu_custom_call.1} parent=1 // pred_fallthru
      _
    // Predicated region
    $region30: #{tpu_custom_call.1} parent=1 // pred_check
      _
    $region31: #{tpu_custom_call.1} parent=1 // pred_check_branch
      %31 = sbr.rel (0) target = $region33
    $region32: #{tpu_custom_call.1} parent=1 // pred_region
      _
    $region33: #{tpu_custom_call.1} parent=1 // pred_fallthru
      _
    // Predicated region
    $region34: #{tpu_custom_call.1} parent=1 // pred_check
      _
    $region35: #{tpu_custom_call.1} parent=1 // pred_check_branch
      %33 = sbr.rel (0) target = $region37
    $region36: #{tpu_custom_call.1} parent=1 // pred_region
      _
    $region37: #{tpu_custom_call.1} parent=1 // pred_fallthru
      _
    %v34 = vld [vmem:[%s0] sm:$0xff]
    %v35 = vld [vmem:[%s0 + $0x8] sm:$0xff]
    %v36 = vld [vmem:[%s0 + $0x10] sm:$0xff]
    %v37 = vld [vmem:[%s0 + $0x18] sm:$0xff]
    %v38 = vld [vmem:[%s0 + $0x20] sm:$0xff]
    %v39 = vld [vmem:[%s0 + $0x28] sm:$0xff]
    %v40 = vld [vmem:[%s0 + $0x30] sm:$0xff]
    %v41 = vld [vmem:[%s0 + $0x38] sm:$0xff]
    %v42 = vld [vmem:[%s0 + $0x40] sm:$0xff]
    %v43 = vld [vmem:[%s0 + $0x48] sm:$0xff]
    %v44 = vld [vmem:[%s0 + $0x50] sm:$0xff]
    %v45 = vld [vmem:[%s0 + $0x58] sm:$0xff]
    %v46 = vld [vmem:[%s0 + $0x60] sm:$0xff]
    %v47 = vld [vmem:[%s0 + $0x68] sm:$0xff]
    %v48 = vld [vmem:[%s0 + $0x70] sm:$0xff]
    %v49 = vld [vmem:[%s0 + $0x78] sm:$0xff]
    %v50 = vld [vmem:[%s0 + $0x80] sm:$0xff]
    %v51 = vld [vmem:[%s0 + $0x88] sm:$0xff]
    %v52 = vld [vmem:[%s0 + $0x90] sm:$0xff]
    %v53 = vld [vmem:[%s0 + $0x98] sm:$0xff]
    %v54 = vld [vmem:[%s0 + $0xa0] sm:$0xff]
    %v55 = vld [vmem:[%s0 + $0xa8] sm:$0xff]
    %v56 = vld [vmem:[%s0 + $0xb0] sm:$0xff]
    %v57 = vld [vmem:[%s0 + $0xb8] sm:$0xff]
    %v58 = vld [vmem:[%s0 + $0xc0] sm:$0xff]
    %v59 = vld [vmem:[%s0 + $0xc8] sm:$0xff]
    %v60 = vld [vmem:[%s0 + $0xd0] sm:$0xff]
    %v61 = vld [vmem:[%s0 + $0xd8] sm:$0xff]
    %v62 = vld [vmem:[%s0 + $0xe0] sm:$0xff]
    %v63 = vld [vmem:[%s0 + $0xe8] sm:$0xff]
    %v64 = vld [vmem:[%s0 + $0xf0] sm:$0xff]
    %v65 = vld [vmem:[%s0 + $0xf8] sm:$0xff]
    %v66 = vld [vmem:[%s0 + $0x100] sm:$0xff]
    %v67 = vld [vmem:[%s0 + $0x108] sm:$0xff]
    %v68 = vld [vmem:[%s0 + $0x110] sm:$0xff]
    %v69 = vld [vmem:[%s0 + $0x118] sm:$0xff]
    %v70 = vld [vmem:[%s0 + $0x120] sm:$0xff]
    %v71 = vld [vmem:[%s0 + $0x128] sm:$0xff]
    %v72 = vld [vmem:[%s0 + $0x130] sm:$0xff]
    %v73 = vld [vmem:[%s0 + $0x138] sm:$0xff]
    %v74 = vld [vmem:[%s0 + $0x140] sm:$0xff]
    %v75 = vld [vmem:[%s0 + $0x148] sm:$0xff]
    %v76 = vld [vmem:[%s0 + $0x150] sm:$0xff]
    %v77 = vld [vmem:[%s0 + $0x158] sm:$0xff]
    %v78 = vld [vmem:[%s0 + $0x160] sm:$0xff]
    %v79 = vld [vmem:[%s0 + $0x168] sm:$0xff]
    %v80 = vld [vmem:[%s0 + $0x170] sm:$0xff]
    %v81 = vld [vmem:[%s0 + $0x178] sm:$0xff]
    %v82 = vld [vmem:[%s0 + $0x180] sm:$0xff]
    %v83 = vld [vmem:[%s0 + $0x188] sm:$0xff]
    %v84 = vld [vmem:[%s0 + $0x190] sm:$0xff]
    %v85 = vld [vmem:[%s0 + $0x198] sm:$0xff]
    %v86 = vld [vmem:[%s0 + $0x1a0] sm:$0xff]
    %v87 = vld [vmem:[%s0 + $0x1a8] sm:$0xff]
    %v88 = vld [vmem:[%s0 + $0x1b0] sm:$0xff]
    %v89 = vld [vmem:[%s0 + $0x1b8] sm:$0xff]
    %v90 = vld [vmem:[%s0 + $0x1c0] sm:$0xff]
    %v91 = vld [vmem:[%s0 + $0x1c8] sm:$0xff]
    %v92 = vld [vmem:[%s0 + $0x1d0] sm:$0xff]
    %v93 = vld [vmem:[%s0 + $0x1d8] sm:$0xff]
    %v94 = vld [vmem:[%s0 + $0x1e0] sm:$0xff]
    %v95 = vld [vmem:[%s0 + $0x1e8] sm:$0xff]
    %v96 = vld [vmem:[%s0 + $0x1f0] sm:$0xff]
    %v97 = vld [vmem:[%s0 + $0x1f8] sm:$0xff]
    %v98 = vld [vmem:[%s1] sm:$0x3]
    %v100 = vlaneseq
    %v101 = vshrl.u32 %v100, 7
    %v102 = vsub.s32 0, %v101
    %v103 = vrot.slane %v98, %v102
    %v104 = vlaneseq
    %v105 = vshrl.u32 %v104, 7
    %v106 = vsub.s32 1, %v105
    %v107 = vrot.slane %v98, %v106
    %v110 = vmul.f32 %v34, %v103
    %v111 = vmul.f32 %v35, %v107
    %v112 = vmul.f32 %v36, %v103
    %v113 = vmul.f32 %v37, %v107
    %v114 = vmul.f32 %v38, %v103
    %v115 = vmul.f32 %v39, %v107
    %v116 = vmul.f32 %v40, %v103
    %v117 = vmul.f32 %v41, %v107
    %v118 = vmul.f32 %v42, %v103
    %v119 = vmul.f32 %v43, %v107
    %v120 = vmul.f32 %v44, %v103
    %v121 = vmul.f32 %v45, %v107
    %v122 = vmul.f32 %v46, %v103
    %v123 = vmul.f32 %v47, %v107
    %v124 = vmul.f32 %v48, %v103
    %v125 = vmul.f32 %v49, %v107
    %v126 = vmul.f32 %v50, %v103
    %v127 = vmul.f32 %v51, %v107
    %v128 = vmul.f32 %v52, %v103
    %v129 = vmul.f32 %v53, %v107
    %v130 = vmul.f32 %v54, %v103
    %v131 = vmul.f32 %v55, %v107
    %v132 = vmul.f32 %v56, %v103
    %v133 = vmul.f32 %v57, %v107
    %v134 = vmul.f32 %v58, %v103
    %v135 = vmul.f32 %v59, %v107
    %v136 = vmul.f32 %v60, %v103
    %v137 = vmul.f32 %v61, %v107
    %v138 = vmul.f32 %v62, %v103
    %v139 = vmul.f32 %v63, %v107
    %v140 = vmul.f32 %v64, %v103
    %v141 = vmul.f32 %v65, %v107
    %v142 = vmul.f32 %v66, %v103
    %v143 = vmul.f32 %v67, %v107
    %v144 = vmul.f32 %v68, %v103
    %v145 = vmul.f32 %v69, %v107
    %v146 = vmul.f32 %v70, %v103
    %v147 = vmul.f32 %v71, %v107
    %v148 = vmul.f32 %v72, %v103
    %v149 = vmul.f32 %v73, %v107
    %v150 = vmul.f32 %v74, %v103
    %v151 = vmul.f32 %v75, %v107
    %v152 = vmul.f32 %v76, %v103
    %v153 = vmul.f32 %v77, %v107
    %v154 = vmul.f32 %v78, %v103
    %v155 = vmul.f32 %v79, %v107
    %v156 = vmul.f32 %v80, %v103
    %v157 = vmul.f32 %v81, %v107
    %v158 = vmul.f32 %v82, %v103
    %v159 = vmul.f32 %v83, %v107
    %v160 = vmul.f32 %v84, %v103
    %v161 = vmul.f32 %v85, %v107
    %v162 = vmul.f32 %v86, %v103
    %v163 = vmul.f32 %v87, %v107
    %v164 = vmul.f32 %v88, %v103
    %v165 = vmul.f32 %v89, %v107
    %v166 = vmul.f32 %v90, %v103
    %v167 = vmul.f32 %v91, %v107
    %v168 = vmul.f32 %v92, %v103
    %v169 = vmul.f32 %v93, %v107
    %v170 = vmul.f32 %v94, %v103
    %v171 = vmul.f32 %v95, %v107
    %v172 = vmul.f32 %v96, %v103
    %v173 = vmul.f32 %v97, %v107
    %vm174 = vcmask 588800
    %v175 = vsel %vm174, %v111, 0.0
    %v176 = vadd.f32 %v110, %v175
    %177 = vadd.xlane.f32.xlu0 %v176
    %v178 = vpop.xlane.xlu0 %177
    %v179 = vsel %vm174, %v113, 0.0
    %v180 = vadd.f32 %v112, %v179
    %181 = vadd.xlane.f32.xlu0 %v180
    %v182 = vpop.xlane.xlu0 %181
    %v183 = vsel %vm174, %v115, 0.0
    %v184 = vadd.f32 %v114, %v183
    %185 = vadd.xlane.f32.xlu0 %v184
    %v186 = vpop.xlane.xlu0 %185
    %v187 = vsel %vm174, %v117, 0.0
    %v188 = vadd.f32 %v116, %v187
    %189 = vadd.xlane.f32.xlu0 %v188
    %v190 = vpop.xlane.xlu0 %189
    %v191 = vsel %vm174, %v119, 0.0
    %v192 = vadd.f32 %v118, %v191
    %193 = vadd.xlane.f32.xlu0 %v192
    %v194 = vpop.xlane.xlu0 %193
    %v195 = vsel %vm174, %v121, 0.0
    %v196 = vadd.f32 %v120, %v195
    %197 = vadd.xlane.f32.xlu0 %v196
    %v198 = vpop.xlane.xlu0 %197
    %v199 = vsel %vm174, %v123, 0.0
    %v200 = vadd.f32 %v122, %v199
    %201 = vadd.xlane.f32.xlu0 %v200
    %v202 = vpop.xlane.xlu0 %201
    %v203 = vsel %vm174, %v125, 0.0
    %v204 = vadd.f32 %v124, %v203
    %205 = vadd.xlane.f32.xlu0 %v204
    %v206 = vpop.xlane.xlu0 %205
    %v207 = vsel %vm174, %v127, 0.0
    %v208 = vadd.f32 %v126, %v207
    %209 = vadd.xlane.f32.xlu0 %v208
    %v210 = vpop.xlane.xlu0 %209
    %v211 = vsel %vm174, %v129, 0.0
    %v212 = vadd.f32 %v128, %v211
    %213 = vadd.xlane.f32.xlu0 %v212
    %v214 = vpop.xlane.xlu0 %213
    %v215 = vsel %vm174, %v131, 0.0
    %v216 = vadd.f32 %v130, %v215
    %217 = vadd.xlane.f32.xlu0 %v216
    %v218 = vpop.xlane.xlu0 %217
    %v219 = vsel %vm174, %v133, 0.0
    %v220 = vadd.f32 %v132, %v219
    %221 = vadd.xlane.f32.xlu0 %v220
    %v222 = vpop.xlane.xlu0 %221
    %v223 = vsel %vm174, %v135, 0.0
    %v224 = vadd.f32 %v134, %v223
    %225 = vadd.xlane.f32.xlu0 %v224
    %v226 = vpop.xlane.xlu0 %225
    %v227 = vsel %vm174, %v137, 0.0
    %v228 = vadd.f32 %v136, %v227
    %229 = vadd.xlane.f32.xlu0 %v228
    %v230 = vpop.xlane.xlu0 %229
    %v231 = vsel %vm174, %v139, 0.0
    %v232 = vadd.f32 %v138, %v231
    %233 = vadd.xlane.f32.xlu0 %v232
    %v234 = vpop.xlane.xlu0 %233
    %v235 = vsel %vm174, %v141, 0.0
    %v236 = vadd.f32 %v140, %v235
    %237 = vadd.xlane.f32.xlu0 %v236
    %v238 = vpop.xlane.xlu0 %237
    %v239 = vsel %vm174, %v143, 0.0
    %v240 = vadd.f32 %v142, %v239
    %241 = vadd.xlane.f32.xlu0 %v240
    %v242 = vpop.xlane.xlu0 %241
    %v243 = vsel %vm174, %v145, 0.0
    %v244 = vadd.f32 %v144, %v243
    %245 = vadd.xlane.f32.xlu0 %v244
    %v246 = vpop.xlane.xlu0 %245
    %v247 = vsel %vm174, %v147, 0.0
    %v248 = vadd.f32 %v146, %v247
    %249 = vadd.xlane.f32.xlu0 %v248
    %v250 = vpop.xlane.xlu0 %249
    %v251 = vsel %vm174, %v149, 0.0
    %v252 = vadd.f32 %v148, %v251
    %253 = vadd.xlane.f32.xlu0 %v252
    %v254 = vpop.xlane.xlu0 %253
    %v255 = vsel %vm174, %v151, 0.0
    %v256 = vadd.f32 %v150, %v255
    %257 = vadd.xlane.f32.xlu0 %v256
    %v258 = vpop.xlane.xlu0 %257
    %v259 = vsel %vm174, %v153, 0.0
    %v260 = vadd.f32 %v152, %v259
    %261 = vadd.xlane.f32.xlu0 %v260
    %v262 = vpop.xlane.xlu0 %261
    %v263 = vsel %vm174, %v155, 0.0
    %v264 = vadd.f32 %v154, %v263
    %265 = vadd.xlane.f32.xlu0 %v264
    %v266 = vpop.xlane.xlu0 %265
    %v267 = vsel %vm174, %v157, 0.0
    %v268 = vadd.f32 %v156, %v267
    %269 = vadd.xlane.f32.xlu0 %v268
    %v270 = vpop.xlane.xlu0 %269
    %v271 = vsel %vm174, %v159, 0.0
    %v272 = vadd.f32 %v158, %v271
    %273 = vadd.xlane.f32.xlu0 %v272
    %v274 = vpop.xlane.xlu0 %273
    %v275 = vsel %vm174, %v161, 0.0
    %v276 = vadd.f32 %v160, %v275
    %277 = vadd.xlane.f32.xlu0 %v276
    %v278 = vpop.xlane.xlu0 %277
    %v279 = vsel %vm174, %v163, 0.0
    %v280 = vadd.f32 %v162, %v279
    %281 = vadd.xlane.f32.xlu0 %v280
    %v282 = vpop.xlane.xlu0 %281
    %v283 = vsel %vm174, %v165, 0.0
    %v284 = vadd.f32 %v164, %v283
    %285 = vadd.xlane.f32.xlu0 %v284
    %v286 = vpop.xlane.xlu0 %285
    %v287 = vsel %vm174, %v167, 0.0
    %v288 = vadd.f32 %v166, %v287
    %289 = vadd.xlane.f32.xlu0 %v288
    %v290 = vpop.xlane.xlu0 %289
    %v291 = vsel %vm174, %v169, 0.0
    %v292 = vadd.f32 %v168, %v291
    %293 = vadd.xlane.f32.xlu0 %v292
    %v294 = vpop.xlane.xlu0 %293
    %v295 = vsel %vm174, %v171, 0.0
    %v296 = vadd.f32 %v170, %v295
    %297 = vadd.xlane.f32.xlu0 %v296
    %v298 = vpop.xlane.xlu0 %297
    %v299 = vsel %vm174, %v173, 0.0
    %v300 = vadd.f32 %v172, %v299
    %301 = vadd.xlane.f32.xlu0 %v300
    %v302 = vpop.xlane.xlu0 %301
    %s303 = sld [smem:[#allocation2]]
    %v304 = vstv %s303
    %v305 = vadd.f32 %v178, %v304
    %v306 = vadd.f32 %v182, %v304
    %v307 = vadd.f32 %v186, %v304
    %v308 = vadd.f32 %v190, %v304
    %v309 = vadd.f32 %v194, %v304
    %v310 = vadd.f32 %v198, %v304
    %v311 = vadd.f32 %v202, %v304
    %v312 = vadd.f32 %v206, %v304
    %v313 = vadd.f32 %v210, %v304
    %v314 = vadd.f32 %v214, %v304
    %v315 = vadd.f32 %v218, %v304
    %v316 = vadd.f32 %v222, %v304
    %v317 = vadd.f32 %v226, %v304
    %v318 = vadd.f32 %v230, %v304
    %v319 = vadd.f32 %v234, %v304
    %v320 = vadd.f32 %v238, %v304
    %v321 = vadd.f32 %v242, %v304
    %v322 = vadd.f32 %v246, %v304
    %v323 = vadd.f32 %v250, %v304
    %v324 = vadd.f32 %v254, %v304
    %v325 = vadd.f32 %v258, %v304
    %v326 = vadd.f32 %v262, %v304
    %v327 = vadd.f32 %v266, %v304
    %v328 = vadd.f32 %v270, %v304
    %v329 = vadd.f32 %v274, %v304
    %v330 = vadd.f32 %v278, %v304
    %v331 = vadd.f32 %v282, %v304
    %v332 = vadd.f32 %v286, %v304
    %v333 = vadd.f32 %v290, %v304
    %v334 = vadd.f32 %v294, %v304
    %v335 = vadd.f32 %v298, %v304
    %v336 = vadd.f32 %v302, %v304
    %v337 = vmax.f32 %v305, 0.0
    %v338 = vmax.f32 %v306, 0.0
    %v339 = vmax.f32 %v307, 0.0
    %v340 = vmax.f32 %v308, 0.0
    %v341 = vmax.f32 %v309, 0.0
    %v342 = vmax.f32 %v310, 0.0
    %v343 = vmax.f32 %v311, 0.0
    %v344 = vmax.f32 %v312, 0.0
    %v345 = vmax.f32 %v313, 0.0
    %v346 = vmax.f32 %v314, 0.0
    %v347 = vmax.f32 %v315, 0.0
    %v348 = vmax.f32 %v316, 0.0
    %v349 = vmax.f32 %v317, 0.0
    %v350 = vmax.f32 %v318, 0.0
    %v351 = vmax.f32 %v319, 0.0
    %v352 = vmax.f32 %v320, 0.0
    %v353 = vmax.f32 %v321, 0.0
    %v354 = vmax.f32 %v322, 0.0
    %v355 = vmax.f32 %v323, 0.0
    %v356 = vmax.f32 %v324, 0.0
    %v357 = vmax.f32 %v325, 0.0
    %v358 = vmax.f32 %v326, 0.0
    %v359 = vmax.f32 %v327, 0.0
    %v360 = vmax.f32 %v328, 0.0
    %v361 = vmax.f32 %v329, 0.0
    %v362 = vmax.f32 %v330, 0.0
    %v363 = vmax.f32 %v331, 0.0
    %v364 = vmax.f32 %v332, 0.0
    %v365 = vmax.f32 %v333, 0.0
    %v366 = vmax.f32 %v334, 0.0
    %v367 = vmax.f32 %v335, 0.0
    %v368 = vmax.f32 %v336, 0.0
    %v369 = vld [vmem:[%s3] sm:$0xff]
    %v370 = vld [vmem:[%s3 + $0x8] sm:$0xff]
    %v371 = vld [vmem:[%s3 + $0x10] sm:$0xff]
    %v372 = vld [vmem:[%s3 + $0x18] sm:$0xff]
    %v373 = vld [vmem:[%s3 + $0x20] sm:$0xff]
    %v374 = vld [vmem:[%s3 + $0x28] sm:$0xff]
    %v375 = vld [vmem:[%s3 + $0x30] sm:$0xff]
    %v376 = vld [vmem:[%s3 + $0x38] sm:$0xff]
    %v377 = vld [vmem:[%s3 + $0x40] sm:$0xff]
    %v378 = vld [vmem:[%s3 + $0x48] sm:$0xff]
    %v379 = vld [vmem:[%s3 + $0x50] sm:$0xff]
    %v380 = vld [vmem:[%s3 + $0x58] sm:$0xff]
    %v381 = vld [vmem:[%s3 + $0x60] sm:$0xff]
    %v382 = vld [vmem:[%s3 + $0x68] sm:$0xff]
    %v383 = vld [vmem:[%s3 + $0x70] sm:$0xff]
    %v384 = vld [vmem:[%s3 + $0x78] sm:$0xff]
    %v385 = vld [vmem:[%s3 + $0x80] sm:$0xff]
    %v386 = vld [vmem:[%s3 + $0x88] sm:$0xff]
    %v387 = vld [vmem:[%s3 + $0x90] sm:$0xff]
    %v388 = vld [vmem:[%s3 + $0x98] sm:$0xff]
    %v389 = vld [vmem:[%s3 + $0xa0] sm:$0xff]
    %v390 = vld [vmem:[%s3 + $0xa8] sm:$0xff]
    %v391 = vld [vmem:[%s3 + $0xb0] sm:$0xff]
    %v392 = vld [vmem:[%s3 + $0xb8] sm:$0xff]
    %v393 = vld [vmem:[%s3 + $0xc0] sm:$0xff]
    %v394 = vld [vmem:[%s3 + $0xc8] sm:$0xff]
    %v395 = vld [vmem:[%s3 + $0xd0] sm:$0xff]
    %v396 = vld [vmem:[%s3 + $0xd8] sm:$0xff]
    %v397 = vld [vmem:[%s3 + $0xe0] sm:$0xff]
    %v398 = vld [vmem:[%s3 + $0xe8] sm:$0xff]
    %v399 = vld [vmem:[%s3 + $0xf0] sm:$0xff]
    %v400 = vld [vmem:[%s3 + $0xf8] sm:$0xff]
    %v401 = vld [vmem:[%s3 + $0x100] sm:$0xff]
    %v402 = vld [vmem:[%s3 + $0x108] sm:$0xff]
    %v403 = vld [vmem:[%s3 + $0x110] sm:$0xff]
    %v404 = vld [vmem:[%s3 + $0x118] sm:$0xff]
    %v405 = vld [vmem:[%s3 + $0x120] sm:$0xff]
    %v406 = vld [vmem:[%s3 + $0x128] sm:$0xff]
    %v407 = vld [vmem:[%s3 + $0x130] sm:$0xff]
    %v408 = vld [vmem:[%s3 + $0x138] sm:$0xff]
    %v409 = vld [vmem:[%s3 + $0x140] sm:$0xff]
    %v410 = vld [vmem:[%s3 + $0x148] sm:$0xff]
    %v411 = vld [vmem:[%s3 + $0x150] sm:$0xff]
    %v412 = vld [vmem:[%s3 + $0x158] sm:$0xff]
    %v413 = vld [vmem:[%s3 + $0x160] sm:$0xff]
    %v414 = vld [vmem:[%s3 + $0x168] sm:$0xff]
    %v415 = vld [vmem:[%s3 + $0x170] sm:$0xff]
    %v416 = vld [vmem:[%s3 + $0x178] sm:$0xff]
    %v417 = vld [vmem:[%s3 + $0x180] sm:$0xff]
    %v418 = vld [vmem:[%s3 + $0x188] sm:$0xff]
    %v419 = vld [vmem:[%s3 + $0x190] sm:$0xff]
    %v420 = vld [vmem:[%s3 + $0x198] sm:$0xff]
    %v421 = vld [vmem:[%s3 + $0x1a0] sm:$0xff]
    %v422 = vld [vmem:[%s3 + $0x1a8] sm:$0xff]
    %v423 = vld [vmem:[%s3 + $0x1b0] sm:$0xff]
    %v424 = vld [vmem:[%s3 + $0x1b8] sm:$0xff]
    %v425 = vld [vmem:[%s3 + $0x1c0] sm:$0xff]
    %v426 = vld [vmem:[%s3 + $0x1c8] sm:$0xff]
    %v427 = vld [vmem:[%s3 + $0x1d0] sm:$0xff]
    %v428 = vld [vmem:[%s3 + $0x1d8] sm:$0xff]
    %v429 = vld [vmem:[%s3 + $0x1e0] sm:$0xff]
    %v430 = vld [vmem:[%s3 + $0x1e8] sm:$0xff]
    %v431 = vld [vmem:[%s3 + $0x1f0] sm:$0xff]
    %v432 = vld [vmem:[%s3 + $0x1f8] sm:$0xff]
    %v433 = vld [vmem:[%s4] sm:$0xf]
    %v435 = vlaneseq
    %v436 = vshrl.u32 %v435, 7
    %v437 = vsub.s32 0, %v436
    %v438 = vrot.slane %v433, %v437
    %v439 = vlaneseq
    %v440 = vshrl.u32 %v439, 7
    %v441 = vsub.s32 1, %v440
    %v442 = vrot.slane %v433, %v441
    %v443 = vlaneseq
    %v444 = vshrl.u32 %v443, 7
    %v445 = vsub.s32 2, %v444
    %v446 = vrot.slane %v433, %v445
    %v447 = vlaneseq
    %v448 = vshrl.u32 %v447, 7
    %v449 = vsub.s32 3, %v448
    %v450 = vrot.slane %v433, %v449
    %v487 = vlaneseq
    %v488 = vand.u32 %v487, 127
    %v489 = vlaneseq
    %v490 = vshrl.u32 %v489, 7
    %v491 = vsub.s32 %v488, %v490
    %v492 = vrot.slane %v337, %v491
    %v493 = vadd.s32 %v488, 4294967288
    %v494 = vlaneseq
    %v495 = vshrl.u32 %v494, 7
    %v496 = vsub.s32 %v493, %v495
    %v497 = vrot.slane %v338, %v496
    %vm498 = vcmask 130112
    %v499 = vsel %vm498, %v497, %v492
    %v500 = vadd.s32 %v488, 4294967280
    %v501 = vlaneseq
    %v502 = vshrl.u32 %v501, 7
    %v503 = vsub.s32 %v500, %v502
    %v504 = vrot.slane %v339, %v503
    %vm505 = vcmask 195712
    %v506 = vsel %vm505, %v504, %v499
    %v507 = vadd.s32 %v488, 4294967272
    %v508 = vlaneseq
    %v509 = vshrl.u32 %v508, 7
    %v510 = vsub.s32 %v507, %v509
    %v511 = vrot.slane %v340, %v510
    %vm512 = vcmask 261312
    %v513 = vsel %vm512, %v511, %v506
    %v514 = vadd.s32 %v488, 4294967264
    %v515 = vlaneseq
    %v516 = vshrl.u32 %v515, 7
    %v517 = vsub.s32 %v514, %v516
    %v518 = vrot.slane %v341, %v517
    %vm519 = vcmask 326912
    %v520 = vsel %vm519, %v518, %v513
    %v521 = vadd.s32 %v488, 4294967256
    %v522 = vlaneseq
    %v523 = vshrl.u32 %v522, 7
    %v524 = vsub.s32 %v521, %v523
    %v525 = vrot.slane %v342, %v524
    %vm526 = vcmask 392512
    %v527 = vsel %vm526, %v525, %v520
    %v528 = vadd.s32 %v488, 4294967248
    %v529 = vlaneseq
    %v530 = vshrl.u32 %v529, 7
    %v531 = vsub.s32 %v528, %v530
    %v532 = vrot.slane %v343, %v531
    %vm533 = vcmask 458112
    %v534 = vsel %vm533, %v532, %v527
    %v535 = vadd.s32 %v488, 4294967240
    %v536 = vlaneseq
    %v537 = vshrl.u32 %v536, 7
    %v538 = vsub.s32 %v535, %v537
    %v539 = vrot.slane %v344, %v538
    %vm540 = vcmask 523712
    %v541 = vsel %vm540, %v539, %v534
    %v542 = vadd.s32 %v488, 4294967232
    %v543 = vlaneseq
    %v544 = vshrl.u32 %v543, 7
    %v545 = vsub.s32 %v542, %v544
    %v546 = vrot.slane %v345, %v545
    %vm547 = vcmask 589312
    %v548 = vsel %vm547, %v546, %v541
    %v549 = vadd.s32 %v488, 4294967224
    %v550 = vlaneseq
    %v551 = vshrl.u32 %v550, 7
    %v552 = vsub.s32 %v549, %v551
    %v553 = vrot.slane %v346, %v552
    %vm554 = vcmask 654912
    %v555 = vsel %vm554, %v553, %v548
    %v556 = vadd.s32 %v488, 4294967216
    %v557 = vlaneseq
    %v558 = vshrl.u32 %v557, 7
    %v559 = vsub.s32 %v556, %v558
    %v560 = vrot.slane %v347, %v559
    %vm561 = vcmask 720512
    %v562 = vsel %vm561, %v560, %v555
    %v563 = vadd.s32 %v488, 4294967208
    %v564 = vlaneseq
    %v565 = vshrl.u32 %v564, 7
    %v566 = vsub.s32 %v563, %v565
    %v567 = vrot.slane %v348, %v566
    %vm568 = vcmask 786112
    %v569 = vsel %vm568, %v567, %v562
    %v570 = vadd.s32 %v488, 4294967200
    %v571 = vlaneseq
    %v572 = vshrl.u32 %v571, 7
    %v573 = vsub.s32 %v570, %v572
    %v574 = vrot.slane %v349, %v573
    %vm575 = vcmask 851712
    %v576 = vsel %vm575, %v574, %v569
    %v577 = vadd.s32 %v488, 4294967192
    %v578 = vlaneseq
    %v579 = vshrl.u32 %v578, 7
    %v580 = vsub.s32 %v577, %v579
    %v581 = vrot.slane %v350, %v580
    %vm582 = vcmask 917312
    %v583 = vsel %vm582, %v581, %v576
    %v584 = vadd.s32 %v488, 4294967184
    %v585 = vlaneseq
    %v586 = vshrl.u32 %v585, 7
    %v587 = vsub.s32 %v584, %v586
    %v588 = vrot.slane %v351, %v587
    %vm589 = vcmask 982912
    %v590 = vsel %vm589, %v588, %v583
    %v591 = vadd.s32 %v488, 4294967176
    %v592 = vlaneseq
    %v593 = vshrl.u32 %v592, 7
    %v594 = vsub.s32 %v591, %v593
    %v595 = vrot.slane %v352, %v594
    %vm596 = vcmask 1048512
    %v597 = vsel %vm596, %v595, %v590
    %v598 = vlaneseq
    %v599 = vshrl.u32 %v598, 7
    %v600 = vsub.s32 %v488, %v599
    %v601 = vrot.slane %v353, %v600
    %v602 = vlaneseq
    %v603 = vshrl.u32 %v602, 7
    %v604 = vsub.s32 %v493, %v603
    %v605 = vrot.slane %v354, %v604
    %v606 = vsel %vm498, %v605, %v601
    %v607 = vlaneseq
    %v608 = vshrl.u32 %v607, 7
    %v609 = vsub.s32 %v500, %v608
    %v610 = vrot.slane %v355, %v609
    %v611 = vsel %vm505, %v610, %v606
    %v612 = vlaneseq
    %v613 = vshrl.u32 %v612, 7
    %v614 = vsub.s32 %v507, %v613
    %v615 = vrot.slane %v356, %v614
    %v616 = vsel %vm512, %v615, %v611
    %v617 = vlaneseq
    %v618 = vshrl.u32 %v617, 7
    %v619 = vsub.s32 %v514, %v618
    %v620 = vrot.slane %v357, %v619
    %v621 = vsel %vm519, %v620, %v616
    %v622 = vlaneseq
    %v623 = vshrl.u32 %v622, 7
    %v624 = vsub.s32 %v521, %v623
    %v625 = vrot.slane %v358, %v624
    %v626 = vsel %vm526, %v625, %v621
    %v627 = vlaneseq
    %v628 = vshrl.u32 %v627, 7
    %v629 = vsub.s32 %v528, %v628
    %v630 = vrot.slane %v359, %v629
    %v631 = vsel %vm533, %v630, %v626
    %v632 = vlaneseq
    %v633 = vshrl.u32 %v632, 7
    %v634 = vsub.s32 %v535, %v633
    %v635 = vrot.slane %v360, %v634
    %v636 = vsel %vm540, %v635, %v631
    %v637 = vlaneseq
    %v638 = vshrl.u32 %v637, 7
    %v639 = vsub.s32 %v542, %v638
    %v640 = vrot.slane %v361, %v639
    %v641 = vsel %vm547, %v640, %v636
    %v642 = vlaneseq
    %v643 = vshrl.u32 %v642, 7
    %v644 = vsub.s32 %v549, %v643
    %v645 = vrot.slane %v362, %v644
    %v646 = vsel %vm554, %v645, %v641
    %v647 = vlaneseq
    %v648 = vshrl.u32 %v647, 7
    %v649 = vsub.s32 %v556, %v648
    %v650 = vrot.slane %v363, %v649
    %v651 = vsel %vm561, %v650, %v646
    %v652 = vlaneseq
    %v653 = vshrl.u32 %v652, 7
    %v654 = vsub.s32 %v563, %v653
    %v655 = vrot.slane %v364, %v654
    %v656 = vsel %vm568, %v655, %v651
    %v657 = vlaneseq
    %v658 = vshrl.u32 %v657, 7
    %v659 = vsub.s32 %v570, %v658
    %v660 = vrot.slane %v365, %v659
    %v661 = vsel %vm575, %v660, %v656
    %v662 = vlaneseq
    %v663 = vshrl.u32 %v662, 7
    %v664 = vsub.s32 %v577, %v663
    %v665 = vrot.slane %v366, %v664
    %v666 = vsel %vm582, %v665, %v661
    %v667 = vlaneseq
    %v668 = vshrl.u32 %v667, 7
    %v669 = vsub.s32 %v584, %v668
    %v670 = vrot.slane %v367, %v669
    %v671 = vsel %vm589, %v670, %v666
    %v672 = vlaneseq
    %v673 = vshrl.u32 %v672, 7
    %v674 = vsub.s32 %v591, %v673
    %v675 = vrot.slane %v368, %v674
    %v676 = vsel %vm596, %v675, %v671
    %vm677 = vcmask 1041409
    %v678 = vsel %vm677, %v676, %v597
    %680 = vmatprep.subr.mxu0 %v370
    %681 = vmatpush1.msra.mxu0 %v369
    %682 = vmatprep.subr.mxu0 %v374
    %683 = vmatpush1.msra.mxu0 %v373
    %684 = vmatprep.subr.mxu0 %v378
    %685 = vmatpush1.msra.mxu0 %v377
    %686 = vmatprep.subr.mxu0 %v382
    %687 = vmatpush1.msra.mxu0 %v381
    %688 = vmatprep.subr.mxu0 %v386
    %689 = vmatpush1.msra.mxu0 %v385
    %690 = vmatprep.subr.mxu0 %v390
    %691 = vmatpush1.msra.mxu0 %v389
    %692 = vmatprep.subr.mxu0 %v394
    %693 = vmatpush1.msra.mxu0 %v393
    %694 = vmatprep.subr.mxu0 %v398
    %695 = vmatpush1.msra.mxu0 %v397
    %696 = vmatprep.subr.mxu0 %v402
    %697 = vmatpush1.msra.mxu0 %v401
    %698 = vmatprep.subr.mxu0 %v406
    %699 = vmatpush1.msra.mxu0 %v405
    %700 = vmatprep.subr.mxu0 %v410
    %701 = vmatpush1.msra.mxu0 %v409
    %702 = vmatprep.subr.mxu0 %v414
    %703 = vmatpush1.msra.mxu0 %v413
    %704 = vmatprep.subr.mxu0 %v418
    %705 = vmatpush1.msra.mxu0 %v417
    %706 = vmatprep.subr.mxu0 %v422
    %707 = vmatpush1.msra.mxu0 %v421
    %708 = vmatprep.subr.mxu0 %v426
    %709 = vmatpush1.msra.mxu0 %v425
    %710 = vmatprep.subr.mxu0 %v430
    %711 = vmatpush1.msra.mxu0 %v429
    %712 = vmatprep.subr.mxu0 0.0
    %713 = vmatpush1.msra.mxu0 0.0
    %714 = vmatprep.subr.mxu0 0.0
    %715 = vmatpush1.msra.mxu0 0.0
    %716 = vmatprep.subr.mxu0 0.0
    %717 = vmatpush1.msra.mxu0 0.0
    %718 = vmatprep.subr.mxu0 0.0
    %719 = vmatpush1.msra.mxu0 0.0
    %720 = vmatprep.subr.mxu0 0.0
    %721 = vmatpush1.msra.mxu0 0.0
    %722 = vmatprep.subr.mxu0 0.0
    %723 = vmatpush1.msra.mxu0 0.0
    %724 = vmatprep.subr.mxu0 0.0
    %725 = vmatpush1.msra.mxu0 0.0
    %726 = vmatprep.subr.mxu0 0.0
    %727 = vmatpush1.msra.mxu0 0.0
    %728 = vmatprep.subr.mxu0 0.0
    %729 = vmatpush1.msra.mxu0 0.0
    %730 = vmatprep.subr.mxu0 0.0
    %731 = vmatpush1.msra.mxu0 0.0
    %732 = vmatprep.subr.mxu0 0.0
    %733 = vmatpush1.msra.mxu0 0.0
    %734 = vmatprep.subr.mxu0 0.0
    %735 = vmatpush1.msra.mxu0 0.0
    %736 = vmatprep.subr.mxu0 0.0
    %737 = vmatpush1.msra.mxu0 0.0
    %738 = vmatprep.subr.mxu0 0.0
    %739 = vmatpush1.msra.mxu0 0.0
    %740 = vmatprep.subr.mxu0 0.0
    %741 = vmatpush1.msra.mxu0 0.0
    %742 = vmatprep.subr.mxu0 0.0
    %743 = vmatpush1.msra.mxu0 0.0
    %744 = vmatprep.mubr.f32.mxu0 0.0
    %745 = vmatmul.mubr.f32.gmra.mrb[0].mxu0 %v678
    %v746 = vpop.f32.mrb[0].mxu0
    %v747 = vadd.f32 %v438, %v746
    %v748 = vpop.f32.mrb[0].mxu0
    %v749 = vadd.f32 %v442, %v748
    %750 = vdwg.mxu0
    %751 = vmatprep.subr.mxu0 %v372
    %752 = vmatpush1.msra.mxu0 %v371
    %753 = vmatprep.subr.mxu0 %v376
    %754 = vmatpush1.msra.mxu0 %v375
    %755 = vmatprep.subr.mxu0 %v380
    %756 = vmatpush1.msra.mxu0 %v379
    %757 = vmatprep.subr.mxu0 %v384
    %758 = vmatpush1.msra.mxu0 %v383
    %759 = vmatprep.subr.mxu0 %v388
    %760 = vmatpush1.msra.mxu0 %v387
    %761 = vmatprep.subr.mxu0 %v392
    %762 = vmatpush1.msra.mxu0 %v391
    %763 = vmatprep.subr.mxu0 %v396
    %764 = vmatpush1.msra.mxu0 %v395
    %765 = vmatprep.subr.mxu0 %v400
    %766 = vmatpush1.msra.mxu0 %v399
    %767 = vmatprep.subr.mxu0 %v404
    %768 = vmatpush1.msra.mxu0 %v403
    %769 = vmatprep.subr.mxu0 %v408
    %770 = vmatpush1.msra.mxu0 %v407
    %771 = vmatprep.subr.mxu0 %v412
    %772 = vmatpush1.msra.mxu0 %v411
    %773 = vmatprep.subr.mxu0 %v416
    %774 = vmatpush1.msra.mxu0 %v415
    %775 = vmatprep.subr.mxu0 %v420
    %776 = vmatpush1.msra.mxu0 %v419
    %777 = vmatprep.subr.mxu0 %v424
    %778 = vmatpush1.msra.mxu0 %v423
    %779 = vmatprep.subr.mxu0 %v428
    %780 = vmatpush1.msra.mxu0 %v427
    %781 = vmatprep.subr.mxu0 %v432
    %782 = vmatpush1.msra.mxu0 %v431
    %783 = vmatprep.subr.mxu0 0.0
    %784 = vmatpush1.msra.mxu0 0.0
    %785 = vmatprep.subr.mxu0 0.0
    %786 = vmatpush1.msra.mxu0 0.0
    %787 = vmatprep.subr.mxu0 0.0
    %788 = vmatpush1.msra.mxu0 0.0
    %789 = vmatprep.subr.mxu0 0.0
    %790 = vmatpush1.msra.mxu0 0.0
    %791 = vmatprep.subr.mxu0 0.0
    %792 = vmatpush1.msra.mxu0 0.0
    %793 = vmatprep.subr.mxu0 0.0
    %794 = vmatpush1.msra.mxu0 0.0
    %795 = vmatprep.subr.mxu0 0.0
    %796 = vmatpush1.msra.mxu0 0.0
    %797 = vmatprep.subr.mxu0 0.0
    %798 = vmatpush1.msra.mxu0 0.0
    %799 = vmatprep.subr.mxu0 0.0
    %800 = vmatpush1.msra.mxu0 0.0
    %801 = vmatprep.subr.mxu0 0.0
    %802 = vmatpush1.msra.mxu0 0.0
    %803 = vmatprep.subr.mxu0 0.0
    %804 = vmatpush1.msra.mxu0 0.0
    %805 = vmatprep.subr.mxu0 0.0
    %806 = vmatpush1.msra.mxu0 0.0
    %807 = vmatprep.subr.mxu0 0.0
    %808 = vmatpush1.msra.mxu0 0.0
    %809 = vmatprep.subr.mxu0 0.0
    %810 = vmatpush1.msra.mxu0 0.0
    %811 = vmatprep.subr.mxu0 0.0
    %812 = vmatpush1.msra.mxu0 0.0
    %813 = vmatprep.subr.mxu0 0.0
    %814 = vmatpush1.msra.mxu0 0.0
    %815 = vmatprep.mubr.f32.mxu0 0.0
    %816 = vmatmul.mubr.f32.gmra.mrb[0].mxu0 %v678
    %v817 = vpop.f32.mrb[0].mxu0
    %v818 = vadd.f32 %v446, %v817
    %v819 = vpop.f32.mrb[0].mxu0
    %v820 = vadd.f32 %v450, %v819
    %821 = vdwg.mxu0
    %v822 = vmax.f32 %v747, 0.0
    %v823 = vmax.f32 %v749, 0.0
    %v824 = vmax.f32 %v818, 0.0
    %v825 = vmax.f32 %v820, 0.0
    %v826 = vld [vmem:[%s5] sm:$0xff]
    %v827 = vld [vmem:[%s5 + $0x8] sm:$0xff]
    %v828 = vld [vmem:[%s5 + $0x10] sm:$0xff]
    %v829 = vld [vmem:[%s5 + $0x18] sm:$0xff]
    %v830 = vld [vmem:[%s5 + $0x20] sm:$0xff]
    %v831 = vld [vmem:[%s5 + $0x28] sm:$0xff]
    %v832 = vld [vmem:[%s5 + $0x30] sm:$0xff]
    %v833 = vld [vmem:[%s5 + $0x38] sm:$0xff]
    %v834 = vld [vmem:[%s5 + $0x40] sm:$0xff]
    %v835 = vld [vmem:[%s5 + $0x48] sm:$0xff]
    %v836 = vld [vmem:[%s5 + $0x50] sm:$0xff]
    %v837 = vld [vmem:[%s5 + $0x58] sm:$0xff]
    %v838 = vld [vmem:[%s5 + $0x60] sm:$0xff]
    %v839 = vld [vmem:[%s5 + $0x68] sm:$0xff]
    %v840 = vld [vmem:[%s5 + $0x70] sm:$0xff]
    %v841 = vld [vmem:[%s5 + $0x78] sm:$0xff]
    %v842 = vld [vmem:[%s5 + $0x80] sm:$0xff]
    %v843 = vld [vmem:[%s5 + $0x88] sm:$0xff]
    %v844 = vld [vmem:[%s5 + $0x90] sm:$0xff]
    %v845 = vld [vmem:[%s5 + $0x98] sm:$0xff]
    %v846 = vld [vmem:[%s5 + $0xa0] sm:$0xff]
    %v847 = vld [vmem:[%s5 + $0xa8] sm:$0xff]
    %v848 = vld [vmem:[%s5 + $0xb0] sm:$0xff]
    %v849 = vld [vmem:[%s5 + $0xb8] sm:$0xff]
    %v850 = vld [vmem:[%s5 + $0xc0] sm:$0xff]
    %v851 = vld [vmem:[%s5 + $0xc8] sm:$0xff]
    %v852 = vld [vmem:[%s5 + $0xd0] sm:$0xff]
    %v853 = vld [vmem:[%s5 + $0xd8] sm:$0xff]
    %v854 = vld [vmem:[%s5 + $0xe0] sm:$0xff]
    %v855 = vld [vmem:[%s5 + $0xe8] sm:$0xff]
    %v856 = vld [vmem:[%s5 + $0xf0] sm:$0xff]
    %v857 = vld [vmem:[%s5 + $0xf8] sm:$0xff]
    %v858 = vld [vmem:[%s5 + $0x100] sm:$0xff]
    %v859 = vld [vmem:[%s5 + $0x108] sm:$0xff]
    %v860 = vld [vmem:[%s5 + $0x110] sm:$0xff]
    %v861 = vld [vmem:[%s5 + $0x118] sm:$0xff]
    %v862 = vld [vmem:[%s5 + $0x120] sm:$0xff]
    %v863 = vld [vmem:[%s5 + $0x128] sm:$0xff]
    %v864 = vld [vmem:[%s5 + $0x130] sm:$0xff]
    %v865 = vld [vmem:[%s5 + $0x138] sm:$0xff]
    %v866 = vld [vmem:[%s5 + $0x140] sm:$0xff]
    %v867 = vld [vmem:[%s5 + $0x148] sm:$0xff]
    %v868 = vld [vmem:[%s5 + $0x150] sm:$0xff]
    %v869 = vld [vmem:[%s5 + $0x158] sm:$0xff]
    %v870 = vld [vmem:[%s5 + $0x160] sm:$0xff]
    %v871 = vld [vmem:[%s5 + $0x168] sm:$0xff]
    %v872 = vld [vmem:[%s5 + $0x170] sm:$0xff]
    %v873 = vld [vmem:[%s5 + $0x178] sm:$0xff]
    %v874 = vld [vmem:[%s5 + $0x180] sm:$0xff]
    %v875 = vld [vmem:[%s5 + $0x188] sm:$0xff]
    %v876 = vld [vmem:[%s5 + $0x190] sm:$0xff]
    %v877 = vld [vmem:[%s5 + $0x198] sm:$0xff]
    %v878 = vld [vmem:[%s5 + $0x1a0] sm:$0xff]
    %v879 = vld [vmem:[%s5 + $0x1a8] sm:$0xff]
    %v880 = vld [vmem:[%s5 + $0x1b0] sm:$0xff]
    %v881 = vld [vmem:[%s5 + $0x1b8] sm:$0xff]
    %v882 = vld [vmem:[%s5 + $0x1c0] sm:$0xff]
    %v883 = vld [vmem:[%s5 + $0x1c8] sm:$0xff]
    %v884 = vld [vmem:[%s5 + $0x1d0] sm:$0xff]
    %v885 = vld [vmem:[%s5 + $0x1d8] sm:$0xff]
    %v886 = vld [vmem:[%s5 + $0x1e0] sm:$0xff]
    %v887 = vld [vmem:[%s5 + $0x1e8] sm:$0xff]
    %v888 = vld [vmem:[%s5 + $0x1f0] sm:$0xff]
    %v889 = vld [vmem:[%s5 + $0x1f8] sm:$0xff]
    %v890 = vld [vmem:[%s6] sm:$0x1]
    %v892 = vlaneseq
    %v893 = vshrl.u32 %v892, 7
    %v894 = vsub.s32 0, %v893
    %v895 = vrot.slane %v890, %v894
    %897 = vmatprep.subr.mxu0 0.0
    %898 = vmatpush1.msra.mxu0 %v826
    %899 = vmatprep.subr.mxu0 0.0
    %900 = vmatpush1.msra.mxu0 %v827
    %901 = vmatprep.subr.mxu0 0.0
    %902 = vmatpush1.msra.mxu0 %v828
    %903 = vmatprep.subr.mxu0 0.0
    %904 = vmatpush1.msra.mxu0 %v829
    %905 = vmatprep.subr.mxu0 0.0
    %906 = vmatpush1.msra.mxu0 %v830
    %907 = vmatprep.subr.mxu0 0.0
    %908 = vmatpush1.msra.mxu0 %v831
    %909 = vmatprep.subr.mxu0 0.0
    %910 = vmatpush1.msra.mxu0 %v832
    %911 = vmatprep.subr.mxu0 0.0
    %912 = vmatpush1.msra.mxu0 %v833
    %913 = vmatprep.subr.mxu0 0.0
    %914 = vmatpush1.msra.mxu0 %v834
    %915 = vmatprep.subr.mxu0 0.0
    %916 = vmatpush1.msra.mxu0 %v835
    %917 = vmatprep.subr.mxu0 0.0
    %918 = vmatpush1.msra.mxu0 %v836
    %919 = vmatprep.subr.mxu0 0.0
    %920 = vmatpush1.msra.mxu0 %v837
    %921 = vmatprep.subr.mxu0 0.0
    %922 = vmatpush1.msra.mxu0 %v838
    %923 = vmatprep.subr.mxu0 0.0
    %924 = vmatpush1.msra.mxu0 %v839
    %925 = vmatprep.subr.mxu0 0.0
    %926 = vmatpush1.msra.mxu0 %v840
    %927 = vmatprep.subr.mxu0 0.0
    %928 = vmatpush1.msra.mxu0 %v841
    %929 = vmatprep.subr.mxu0 0.0
    %930 = vmatpush1.msra.mxu0 %v842
    %931 = vmatprep.subr.mxu0 0.0
    %932 = vmatpush1.msra.mxu0 %v843
    %933 = vmatprep.subr.mxu0 0.0
    %934 = vmatpush1.msra.mxu0 %v844
    %935 = vmatprep.subr.mxu0 0.0
    %936 = vmatpush1.msra.mxu0 %v845
    %937 = vmatprep.subr.mxu0 0.0
    %938 = vmatpush1.msra.mxu0 %v846
    %939 = vmatprep.subr.mxu0 0.0
    %940 = vmatpush1.msra.mxu0 %v847
    %941 = vmatprep.subr.mxu0 0.0
    %942 = vmatpush1.msra.mxu0 %v848
    %943 = vmatprep.subr.mxu0 0.0
    %944 = vmatpush1.msra.mxu0 %v849
    %945 = vmatprep.subr.mxu0 0.0
    %946 = vmatpush1.msra.mxu0 %v850
    %947 = vmatprep.subr.mxu0 0.0
    %948 = vmatpush1.msra.mxu0 %v851
    %949 = vmatprep.subr.mxu0 0.0
    %950 = vmatpush1.msra.mxu0 %v852
    %951 = vmatprep.subr.mxu0 0.0
    %952 = vmatpush1.msra.mxu0 %v853
    %953 = vmatprep.subr.mxu0 0.0
    %954 = vmatpush1.msra.mxu0 %v854
    %955 = vmatprep.subr.mxu0 0.0
    %956 = vmatpush1.msra.mxu0 %v855
    %957 = vmatprep.subr.mxu0 0.0
    %958 = vmatpush1.msra.mxu0 %v856
    %959 = vmatprep.subr.mxu0 0.0
    %960 = vmatpush1.msra.mxu0 %v857
    %961 = vmatprep.mubr.f32.mxu0 %v823
    %962 = vmatmul.mubr.f32.gmra.mrb[0].mxu0 %v822
    %v963 = vpop.f32.mrb[0].mxu0
    %v964 = vadd.f32 %v895, %v963
    %v965 = vpop.f32.mrb[0].mxu0
    %966 = vdwg.mxu0
    %967 = vmatprep.subr.mxu0 0.0
    %968 = vmatpush1.msra.mxu0 %v858
    %969 = vmatprep.subr.mxu0 0.0
    %970 = vmatpush1.msra.mxu0 %v859
    %971 = vmatprep.subr.mxu0 0.0
    %972 = vmatpush1.msra.mxu0 %v860
    %973 = vmatprep.subr.mxu0 0.0
    %974 = vmatpush1.msra.mxu0 %v861
    %975 = vmatprep.subr.mxu0 0.0
    %976 = vmatpush1.msra.mxu0 %v862
    %977 = vmatprep.subr.mxu0 0.0
    %978 = vmatpush1.msra.mxu0 %v863
    %979 = vmatprep.subr.mxu0 0.0
    %980 = vmatpush1.msra.mxu0 %v864
    %981 = vmatprep.subr.mxu0 0.0
    %982 = vmatpush1.msra.mxu0 %v865
    %983 = vmatprep.subr.mxu0 0.0
    %984 = vmatpush1.msra.mxu0 %v866
    %985 = vmatprep.subr.mxu0 0.0
    %986 = vmatpush1.msra.mxu0 %v867
    %987 = vmatprep.subr.mxu0 0.0
    %988 = vmatpush1.msra.mxu0 %v868
    %989 = vmatprep.subr.mxu0 0.0
    %990 = vmatpush1.msra.mxu0 %v869
    %991 = vmatprep.subr.mxu0 0.0
    %992 = vmatpush1.msra.mxu0 %v870
    %993 = vmatprep.subr.mxu0 0.0
    %994 = vmatpush1.msra.mxu0 %v871
    %995 = vmatprep.subr.mxu0 0.0
    %996 = vmatpush1.msra.mxu0 %v872
    %997 = vmatprep.subr.mxu0 0.0
    %998 = vmatpush1.msra.mxu0 %v873
    %999 = vmatprep.subr.mxu0 0.0
    %1000 = vmatpush1.msra.mxu0 %v874
    %1001 = vmatprep.subr.mxu0 0.0
    %1002 = vmatpush1.msra.mxu0 %v875
    %1003 = vmatprep.subr.mxu0 0.0
    %1004 = vmatpush1.msra.mxu0 %v876
    %1005 = vmatprep.subr.mxu0 0.0
    %1006 = vmatpush1.msra.mxu0 %v877
    %1007 = vmatprep.subr.mxu0 0.0
    %1008 = vmatpush1.msra.mxu0 %v878
    %1009 = vmatprep.subr.mxu0 0.0
    %1010 = vmatpush1.msra.mxu0 %v879
    %1011 = vmatprep.subr.mxu0 0.0
    %1012 = vmatpush1.msra.mxu0 %v880
    %1013 = vmatprep.subr.mxu0 0.0
    %1014 = vmatpush1.msra.mxu0 %v881
    %1015 = vmatprep.subr.mxu0 0.0
    %1016 = vmatpush1.msra.mxu0 %v882
    %1017 = vmatprep.subr.mxu0 0.0
    %1018 = vmatpush1.msra.mxu0 %v883
    %1019 = vmatprep.subr.mxu0 0.0
    %1020 = vmatpush1.msra.mxu0 %v884
    %1021 = vmatprep.subr.mxu0 0.0
    %1022 = vmatpush1.msra.mxu0 %v885
    %1023 = vmatprep.subr.mxu0 0.0
    %1024 = vmatpush1.msra.mxu0 %v886
    %1025 = vmatprep.subr.mxu0 0.0
    %1026 = vmatpush1.msra.mxu0 %v887
    %1027 = vmatprep.subr.mxu0 0.0
    %1028 = vmatpush1.msra.mxu0 %v888
    %1029 = vmatprep.subr.mxu0 0.0
    %1030 = vmatpush1.msra.mxu0 %v889
    %1031 = vmatprep.mubr.f32.mxu0 %v825
    %1032 = vmatmul.mubr.f32.gmra.mrb[0].mxu0 %v824
    %v1033 = vpop.f32.mrb[0].mxu0
    %v1034 = vadd.f32 %v964, %v1033
    %v1035 = vpop.f32.mrb[0].mxu0
    %1036 = vdwg.mxu0
    %v1037 = vmax.f32 %v1034, 0.0
    %v1038 = vld [vmem:[%s7] sm:$0xff]
    %v1039 = vld [vmem:[%s7 + $0x8] sm:$0xff]
    %v1040 = vld [vmem:[%s7 + $0x10] sm:$0xff]
    %v1041 = vld [vmem:[%s7 + $0x18] sm:$0xff]
    %v1042 = vld [vmem:[%s7 + $0x20] sm:$0xff]
    %v1043 = vld [vmem:[%s7 + $0x28] sm:$0xff]
    %v1044 = vld [vmem:[%s7 + $0x30] sm:$0xff]
    %v1045 = vld [vmem:[%s7 + $0x38] sm:$0xff]
    %v1046 = vld [vmem:[%s7 + $0x40] sm:$0xff]
    %v1047 = vld [vmem:[%s7 + $0x48] sm:$0xff]
    %v1048 = vld [vmem:[%s7 + $0x50] sm:$0xff]
    %v1049 = vld [vmem:[%s7 + $0x58] sm:$0xff]
    %v1050 = vld [vmem:[%s7 + $0x60] sm:$0xf]
    %v1051 = vld [vmem:[%s8] sm:$0x1]
    %v1053 = vlaneseq
    %v1054 = vshrl.u32 %v1053, 7
    %v1055 = vsub.s32 0, %v1054
    %v1056 = vrot.slane %v1051, %v1055
    %vm1058 = vcmask 818176
    %v1060 = vsel %vm1058, %v1037, 0
    %vm1062 = vcmask 1043456
    %v1064 = vsel %vm1062, %v1050, 0
    %1066 = vmatprep.subr.mxu0 0.0
    %1067 = vmatpush1.msra.mxu0 %v1038
    %1068 = vmatprep.subr.mxu0 0.0
    %1069 = vmatpush1.msra.mxu0 %v1039
    %1070 = vmatprep.subr.mxu0 0.0
    %1071 = vmatpush1.msra.mxu0 %v1040
    %1072 = vmatprep.subr.mxu0 0.0
    %1073 = vmatpush1.msra.mxu0 %v1041
    %1074 = vmatprep.subr.mxu0 0.0
    %1075 = vmatpush1.msra.mxu0 %v1042
    %1076 = vmatprep.subr.mxu0 0.0
    %1077 = vmatpush1.msra.mxu0 %v1043
    %1078 = vmatprep.subr.mxu0 0.0
    %1079 = vmatpush1.msra.mxu0 %v1044
    %1080 = vmatprep.subr.mxu0 0.0
    %1081 = vmatpush1.msra.mxu0 %v1045
    %1082 = vmatprep.subr.mxu0 0.0
    %1083 = vmatpush1.msra.mxu0 %v1046
    %1084 = vmatprep.subr.mxu0 0.0
    %1085 = vmatpush1.msra.mxu0 %v1047
    %1086 = vmatprep.subr.mxu0 0.0
    %1087 = vmatpush1.msra.mxu0 %v1048
    %1088 = vmatprep.subr.mxu0 0.0
    %1089 = vmatpush1.msra.mxu0 %v1049
    %1090 = vmatprep.subr.mxu0 0.0
    %1091 = vmatpush1.msra.mxu0 %v1064
    %1092 = vmatprep.subr.mxu0 0.0
    %1093 = vmatpush1.msra.mxu0 0.0
    %1094 = vmatprep.subr.mxu0 0.0
    %1095 = vmatpush1.msra.mxu0 0.0
    %1096 = vmatprep.subr.mxu0 0.0
    %1097 = vmatpush1.msra.mxu0 0.0
    %1098 = vmatprep.subr.mxu0 0.0
    %1099 = vmatpush1.msra.mxu0 0.0
    %1100 = vmatprep.subr.mxu0 0.0
    %1101 = vmatpush1.msra.mxu0 0.0
    %1102 = vmatprep.subr.mxu0 0.0
    %1103 = vmatpush1.msra.mxu0 0.0
    %1104 = vmatprep.subr.mxu0 0.0
    %1105 = vmatpush1.msra.mxu0 0.0
    %1106 = vmatprep.subr.mxu0 0.0
    %1107 = vmatpush1.msra.mxu0 0.0
    %1108 = vmatprep.subr.mxu0 0.0
    %1109 = vmatpush1.msra.mxu0 0.0
    %1110 = vmatprep.subr.mxu0 0.0
    %1111 = vmatpush1.msra.mxu0 0.0
    %1112 = vmatprep.subr.mxu0 0.0
    %1113 = vmatpush1.msra.mxu0 0.0
    %1114 = vmatprep.subr.mxu0 0.0
    %1115 = vmatpush1.msra.mxu0 0.0
    %1116 = vmatprep.subr.mxu0 0.0
    %1117 = vmatpush1.msra.mxu0 0.0
    %1118 = vmatprep.subr.mxu0 0.0
    %1119 = vmatpush1.msra.mxu0 0.0
    %1120 = vmatprep.subr.mxu0 0.0
    %1121 = vmatpush1.msra.mxu0 0.0
    %1122 = vmatprep.subr.mxu0 0.0
    %1123 = vmatpush1.msra.mxu0 0.0
    %1124 = vmatprep.subr.mxu0 0.0
    %1125 = vmatpush1.msra.mxu0 0.0
    %1126 = vmatprep.subr.mxu0 0.0
    %1127 = vmatpush1.msra.mxu0 0.0
    %1128 = vmatprep.subr.mxu0 0.0
    %1129 = vmatpush1.msra.mxu0 0.0
    %1130 = vmatprep.mubr.f32.mxu0 0.0
    %1131 = vmatmul.mubr.f32.gmra.mrb[0].mxu0 %v1060
    %v1132 = vpop.f32.mrb[0].mxu0
    %v1133 = vadd.f32 %v1056, %v1132
    %v1134 = vpop.f32.mrb[0].mxu0
    %1135 = vdwg.mxu0
    %vm1136 = vcmask 74752
    %1137 = vst.msk [vmem:[#allocation3] sm:$0x3] %vm1136, %v1133
    // Predicated region
    $region38: #{tpu_custom_call.1} parent=1 // pred_check
      _
    $region39: #{tpu_custom_call.1} parent=1 // pred_check_branch
      %1139 = sbr.rel (0) target = $region41
    $region40: #{tpu_custom_call.1} parent=1 // pred_region
      %s1141 = ssub.s32 32, 32
      %1142 = vsyncadd [#allocation4], %s1141
      %s1144 = sshll.u32 [#allocation3], 4
      %s1145 = int_to_ptr.vmem [resolvable:$true] %s1144
      %1147 = dma.vmem_to_hbm [thread:$0]  %s1145, 32, %s9, [#allocation4]
    $region41: #{tpu_custom_call.1} parent=1 // pred_fallthru
      _
    // Predicated region
    $region42: #{tpu_custom_call.1} parent=1 // pred_check
      _
    $region43: #{tpu_custom_call.1} parent=1 // pred_check_branch
      %1149 = sbr.rel (0) target = $region45
    $region44: #{tpu_custom_call.1} parent=1 // pred_region
      %1150 = dma.done [#allocation4], 32
    $region45: #{tpu_custom_call.1} parent=1 // pred_fallthru
      _
    %1151 = vsyncpa [#allocation4], 1

</llo_original>
